<compile_context>
chip_gen: v7x
topology: tpu7x:2x2x1
jax: 0.10.0
libtpu: 0.0.40
codegen_flags: <defaults>
</compile_context>

<pallas_src>
import functools

import jax
import jax.numpy as jnp
from jax.experimental import pallas as pl
from jax.experimental.pallas import tpu as pltpu


# ---------------------------------------------------------------------------
# Pallas kernel: all-corner complex channel contraction + (pre-scaled) bias
# ---------------------------------------------------------------------------
def _spectral_modes_kernel(ci, co, mp, xr_ref, xi_ref, wr_ref, wi_ref,
                           br_ref, bi_ref, or_ref, oi_ref):
    # xr/xi : (B, CI*Mp)   input modes, channel i occupies lanes [i*Mp,(i+1)*Mp)
    # wr/wi : (CI, CO*Mp)  weights, row i, output channel o at lanes [o*Mp,...)
    # br/bi : (1, Mp)      delta-scaled bias (per mode, broadcast over B, CO)
    # or/oi : (B, CO*Mp)   output modes
    xr = xr_ref[...]
    xi = xi_ref[...]
    wr = wr_ref[...]
    wi = wi_ref[...]
    br = br_ref[...]
    bi = bi_ref[...]

    # TODO(synk): for production SFNO channel widths replace this unrolled VPU
    # broadcast-multiply with an MXU dot_general over CI, tile CI/CO across a
    # grid ('parallel' CO axis + 'arbitrary' CI reduction with a VMEM
    # accumulator) to stay under the v7x 64 MiB VMEM / 32 MiB scoped default,
    # and mark a leading grid axis 'parallel' to use v7x's second TensorCore.
    for o in range(co):
        acc_r = None
        acc_i = None
        for i in range(ci):                      # CI in {1, 2} -> unrolled
            xri = xr[:, i * mp:(i + 1) * mp]     # (B, Mp), lane-aligned slice
            xii = xi[:, i * mp:(i + 1) * mp]
            wri = wr[i:i + 1, o * mp:(o + 1) * mp]   # (1, Mp)
            wii = wi[i:i + 1, o * mp:(o + 1) * mp]
            pr = xri * wri - xii * wii           # complex multiply, real part
            pi = xri * wii + xii * wri           # complex multiply, imag part
            acc_r = pr if acc_r is None else acc_r + pr
            acc_i = pi if acc_i is None else acc_i + pi
        or_ref[:, o * mp:(o + 1) * mp] = acc_r + br   # unmasked lane-dense store
        oi_ref[:, o * mp:(o + 1) * mp] = acc_i + bi


def spectral_conv_pallas(vh, weights, biases, modes, delta):
    """vh: complex (B, CI, NX, NY, NTF); weights: complex (4, CI, CO, MX, MY, MT);
    biases: complex (4, MX, MY, MT). Returns complex (B, CO, NX, NY, NTF)."""
    mx, my, mt = modes
    B, CI, NX, NY, NTF = vh.shape
    CO = weights.shape[2]
    # Corner blocks must not overlap (concat-scatter == reference .set scatter).
    assert 2 * mx <= NX and 2 * my <= NY and mt <= NTF, (modes, vh.shape)

    M = 4 * mx * my * mt                       # corners folded into lane axis
    Mp = max(128, ((M + 127) // 128) * 128)    # lane-align; pad lanes are zero

    # ---- gather the 4 corner blocks (no data transpose) ---------------------
    # mode flatten order is (ix, x, iy, y, t); the weights are reordered to
    # match instead of transposing the (larger) data tensor.
    gx = jnp.concatenate([vh[:, :, :mx], vh[:, :, NX - mx:]], axis=2)
    gxy = jnp.concatenate([gx[:, :, :, :my], gx[:, :, :, NY - my:]], axis=3)
    G = gxy[..., :mt].reshape(B, CI, M)        # contiguous reshape

    def lane_pack(a, lead):                    # (lead, ..., M) -> (lead, -1)
        if Mp != M:
            a = jnp.pad(a, [(0, 0)] * (a.ndim - 1) + [(0, Mp - M)])
        return a.reshape(lead, -1)

    # real / imag passed as separate refs: no host-side lane-concat packing.
    xr = lane_pack(jnp.real(G).astype(jnp.float32), B)        # (B, CI*Mp)
    xi = lane_pack(jnp.imag(G).astype(jnp.float32), B)

    # weights: (4,CI,CO,mx,my,mt), corner c = ix + 2*iy  ->  (CI, CO*Mp) with
    # mode order (ix, x, iy, y, t) matching the data gather above.
    w6 = weights.reshape(2, 2, CI, CO, mx, my, mt)             # (iy,ix,i,o,x,y,t)
    w = jnp.transpose(w6, (2, 3, 1, 4, 0, 5, 6)).reshape(CI, CO, M)
    wr = lane_pack(jnp.real(w).astype(jnp.float32), CI)        # (CI, CO*Mp)
    wi = lane_pack(jnp.imag(w).astype(jnp.float32), CI)

    # bias: delta folded in on the host, reordered the same way.
    b6 = (delta * biases).reshape(2, 2, mx, my, mt)            # (iy,ix,x,y,t)
    bflat = jnp.transpose(b6, (1, 2, 0, 3, 4)).reshape(1, M)   # (ix,x,iy,y,t)
    br = lane_pack(jnp.real(bflat).astype(jnp.float32), 1)     # (1, Mp)
    bi = lane_pack(jnp.imag(bflat).astype(jnp.float32), 1)

    flops = 8 * B * CI * CO * M
    bytes_accessed = 4 * (2 * B * CI * Mp + 2 * CI * CO * Mp + 2 * Mp
                          + 2 * B * CO * Mp)

    kernel = functools.partial(_spectral_modes_kernel, CI, CO, Mp)
    out_re, out_im = pl.pallas_call(
        kernel,
        out_shape=(jax.ShapeDtypeStruct((B, CO * Mp), jnp.float32),
                   jax.ShapeDtypeStruct((B, CO * Mp), jnp.float32)),
        grid=(1,),                               # single invocation
        in_specs=[
            pl.BlockSpec((B, CI * Mp), lambda i: (0, 0)),
            pl.BlockSpec((B, CI * Mp), lambda i: (0, 0)),
            pl.BlockSpec((CI, CO * Mp), lambda i: (0, 0)),
            pl.BlockSpec((CI, CO * Mp), lambda i: (0, 0)),
            pl.BlockSpec((1, Mp), lambda i: (0, 0)),
            pl.BlockSpec((1, Mp), lambda i: (0, 0)),
        ],
        out_specs=[
            pl.BlockSpec((B, CO * Mp), lambda i: (0, 0)),
            pl.BlockSpec((B, CO * Mp), lambda i: (0, 0)),
        ],
        compiler_params=pltpu.CompilerParams(
            dimension_semantics=("arbitrary",)),
        cost_estimate=pl.CostEstimate(
            flops=flops, transcendentals=0, bytes_accessed=bytes_accessed),
    )(xr, xi, wr, wi, br, bi)

    out_re = out_re.reshape(B, CO, Mp)[:, :, :M]    # drop lane padding
    out_im = out_im.reshape(B, CO, Mp)[:, :, :M]
    out_c = jax.lax.complex(out_re, out_im).astype(vh.dtype)

    # ---- scatter corners back (no data transpose), zero-fill the middles ----
    out_c = out_c.reshape(B, CO, 2, mx, 2, my, mt)             # (b,o,ix,x,iy,y,t)
    zx = jnp.zeros((B, CO, NX - 2 * mx, 2, my, mt), out_c.dtype)
    full_x = jnp.concatenate([out_c[:, :, 0], zx, out_c[:, :, 1]], axis=2)
    zy = jnp.zeros((B, CO, NX, NY - 2 * my, mt), out_c.dtype)
    full_xy = jnp.concatenate(
        [full_x[:, :, :, 0], zy, full_x[:, :, :, 1]], axis=3)
    zt = jnp.zeros((B, CO, NX, NY, NTF - mt), out_c.dtype)
    return jnp.concatenate([full_xy, zt], axis=4)


# ---------------------------------------------------------------------------
# Pure-JAX reference of the spectral conv (for verification only)
# ---------------------------------------------------------------------------
def spectral_conv_ref(vh, weights, biases, modes, delta):
    mx, my, mt = modes
    B, CI, NX, NY, NTF = vh.shape
    CO = weights.shape[2]
    sx = [slice(0, mx), slice(NX - mx, NX)]
    sy = [slice(0, my), slice(NY - my, NY)]
    st = slice(0, mt)
    out = jnp.zeros((B, CO, NX, NY, NTF), dtype=vh.dtype)
    for c in range(4):
        blk = vh[:, :, sx[c % 2], sy[c // 2], st]
        o = jnp.einsum('bixyz,ioxyz->boxyz', blk, weights[c])
        o = o + delta * biases[c][None, None]
        out = out.at[:, :, sx[c % 2], sy[c // 2], st].set(o)
    return out


# ---------------------------------------------------------------------------
# OutConv forward (dim_reduction=1, spatial_padding=0, temporal_padding=True)
# ---------------------------------------------------------------------------
def out_conv_forward(params, v, v_res, out_steps, modes, delta=0.1,
                     spectral_fn=spectral_conv_pallas):
    """v: (b, 1, x, y, t_latent), v_res: (b, x, y, t_in) -> (b, x, y, out_steps)."""
    v_res5 = v_res[:, None]                                  # (b,1,x,y,t_in)
    v = jnp.concatenate([v_res5[..., -2:], v], axis=-1)      # prepend last 2 steps
    # spatial_padding == 0 in this configuration -> no spatial pad.

    # SpectralConvT with temporal_padding=True: left-pad time by its own length.
    t_pad = v.shape[-1]
    v = jnp.pad(v, [(0, 0)] * 4 + [(t_pad, 0)])
    nx, ny, ntp = v.shape[-3:]

    # TODO(synk): rfftn/irfftn have no Pallas TPU primitive; kept as XLA ops.
    v_hat = jnp.fft.rfftn(v, axes=(-3, -2, -1))              # norm='backward'
    v_hat = spectral_fn(v_hat, params['weight'], params['bias'], modes, delta)
    # postprocess = Identity (dim_reduction == 1)

    conv_out_steps = out_steps + 2
    out_len = conv_out_steps + t_pad
    v_out = jnp.fft.irfftn(v_hat, s=(nx, ny, out_len), axes=(-3, -2, -1))
    v_out = v_out[..., -conv_out_steps:]                     # undo temporal padding

    v_out = v_res5[..., -1:] + v_out[..., -out_steps:]
    return jnp.squeeze(v_out, axis=1)


# ---------------------------------------------------------------------------
# Main: deterministic synthetic params / inputs, run, verify
# ---------------------------------------------------------------------------
if __name__ == "__main__":
    B, C = 2, 1                       # dim_reduction = 1 -> in = out = 1 channel
    NX, NY = 16, 16
    T_LAT, T_IN, OUT_STEPS = 8, 6, 6
    MX, MY, MT = 4, 4, 4
    DELTA = 0.1

    key = jax.random.PRNGKey(0)
    k_v, k_res, k_w, k_b, k_v2, k_w2, k_b2 = jax.random.split(key, 7)

    v = jax.random.normal(k_v, (B, C, NX, NY, T_LAT), dtype=jnp.float32)
    v_res = jax.random.normal(k_res, (B, NX, NY, T_IN), dtype=jnp.float32)

    # SpectralConvT weights: 4 x (ci, co, mx, my, mt, 2), init gain * U[0,1)
    gain = 0.5 / (C * C)
    w = gain * jax.random.uniform(k_w, (4, C, C, MX, MY, MT, 2), dtype=jnp.float32)
    weights = w[..., 0] + 1j * w[..., 1]
    # Torch __init__ sets bias to zeros; use small deterministic values here so
    # the delta*bias path is actually exercised.
    b = 0.01 * jax.random.normal(k_b, (4, MX, MY, MT, 2), dtype=jnp.float32)
    biases = b[..., 0] + 1j * b[..., 1]
    params = {'weight': weights, 'bias': biases}

    out = out_conv_forward(params, v, v_res, OUT_STEPS, (MX, MY, MT), DELTA,
                           spectral_fn=spectral_conv_pallas)
    out = jax.block_until_ready(out)

    out_ref = out_conv_forward(params, v, v_res, OUT_STEPS, (MX, MY, MT), DELTA,
                               spectral_fn=spectral_conv_ref)
    out_ref = jax.block_until_ready(out_ref)

    assert out.shape == (B, NX, NY, OUT_STEPS), out.shape
    assert jnp.allclose(out, out_ref, atol=1e-4, rtol=1e-4), (
        float(jnp.max(jnp.abs(out - out_ref))))

    # Extra check: multi-channel (dim_reduction=2 widths) and lane-unaligned
    # modes (M = 4*3*3*3 = 108 -> padded to Mp = 128) spectral conv vs. ref.
    CI2 = CO2 = 2
    MX2 = MY2 = MT2 = 3
    NTF2 = 7
    vh2 = (jax.random.normal(k_v2, (B, CI2, NX, NY, NTF2), dtype=jnp.float32)
           + 1j * jax.random.normal(jax.random.fold_in(k_v2, 1),
                                    (B, CI2, NX, NY, NTF2), dtype=jnp.float32))
    w2 = jax.random.normal(k_w2, (4, CI2, CO2, MX2, MY2, MT2, 2),
                           dtype=jnp.float32)
    weights2 = 0.1 * (w2[..., 0] + 1j * w2[..., 1])
    b2 = 0.01 * jax.random.normal(k_b2, (4, MX2, MY2, MT2, 2), dtype=jnp.float32)
    biases2 = b2[..., 0] + 1j * b2[..., 1]

    got = spectral_conv_pallas(vh2, weights2, biases2, (MX2, MY2, MT2), DELTA)
    ref = spectral_conv_ref(vh2, weights2, biases2, (MX2, MY2, MT2), DELTA)
    got, ref = jax.block_until_ready((got, ref))
    assert jnp.allclose(got, ref, atol=1e-4, rtol=1e-4), (
        float(jnp.max(jnp.abs(got - ref))))

    print("KERNEL_OK")
</pallas_src>

<mosaic_0001>
module attributes {stable_mosaic.version = 11 : i64} {
  func.func @_spectral_modes_kernel(%arg0: i32, %arg1: memref<2x256xf32, #tpu.memory_space<vmem>>, %arg2: memref<2x256xf32, #tpu.memory_space<vmem>>, %arg3: memref<1x256xf32, #tpu.memory_space<vmem>>, %arg4: memref<1x256xf32, #tpu.memory_space<vmem>>, %arg5: memref<1x256xf32, #tpu.memory_space<vmem>>, %arg6: memref<1x256xf32, #tpu.memory_space<vmem>>, %arg7: memref<2x256xf32, #tpu.memory_space<vmem>>, %arg8: memref<2x256xf32, #tpu.memory_space<vmem>>) attributes {dimension_semantics = [#tpu.dimension_semantics<arbitrary>], iteration_bounds = array<i64: 1>, scalar_prefetch = 0 : i64, scratch_operands = 0 : i64, tpu.core_type = #tpu.core_type<tc>, window_params = [{pipeline_mode = #tpu.pipeline_mode<synchronous>, transform_indices = @transform_0, window_bounds = array<i64: 2, 256>}, {pipeline_mode = #tpu.pipeline_mode<synchronous>, transform_indices = @transform_1, window_bounds = array<i64: 2, 256>}, {pipeline_mode = #tpu.pipeline_mode<synchronous>, transform_indices = @transform_2, window_bounds = array<i64: 1, 256>}, {pipeline_mode = #tpu.pipeline_mode<synchronous>, transform_indices = @transform_3, window_bounds = array<i64: 1, 256>}, {pipeline_mode = #tpu.pipeline_mode<synchronous>, transform_indices = @transform_4, window_bounds = array<i64: 1, 256>}, {pipeline_mode = #tpu.pipeline_mode<synchronous>, transform_indices = @transform_5, window_bounds = array<i64: 1, 256>}, {pipeline_mode = #tpu.pipeline_mode<synchronous>, transform_indices = @transform_6, window_bounds = array<i64: 2, 256>}, {pipeline_mode = #tpu.pipeline_mode<synchronous>, transform_indices = @transform_7, window_bounds = array<i64: 2, 256>}]} {
    %c0 = arith.constant 0 : index
    %c0_0 = arith.constant 0 : index
    %0 = vector.load %arg1[%c0, %c0_0] : memref<2x256xf32, #tpu.memory_space<vmem>>, vector<2x256xf32>
    %c0_1 = arith.constant 0 : index
    %c0_2 = arith.constant 0 : index
    %1 = vector.load %arg2[%c0_1, %c0_2] : memref<2x256xf32, #tpu.memory_space<vmem>>, vector<2x256xf32>
    %c0_3 = arith.constant 0 : index
    %c0_4 = arith.constant 0 : index
    %2 = vector.load %arg3[%c0_3, %c0_4] : memref<1x256xf32, #tpu.memory_space<vmem>>, vector<1x256xf32>
    %c0_5 = arith.constant 0 : index
    %c0_6 = arith.constant 0 : index
    %3 = vector.load %arg4[%c0_5, %c0_6] : memref<1x256xf32, #tpu.memory_space<vmem>>, vector<1x256xf32>
    %c0_7 = arith.constant 0 : index
    %c0_8 = arith.constant 0 : index
    %4 = vector.load %arg5[%c0_7, %c0_8] : memref<1x256xf32, #tpu.memory_space<vmem>>, vector<1x256xf32>
    %c0_9 = arith.constant 0 : index
    %c0_10 = arith.constant 0 : index
    %5 = vector.load %arg6[%c0_9, %c0_10] : memref<1x256xf32, #tpu.memory_space<vmem>>, vector<1x256xf32>
    %6 = vector.broadcast %2 : vector<1x256xf32> to vector<2x256xf32>
    %7 = arith.mulf %0, %6 : vector<2x256xf32>
    %8 = vector.broadcast %3 : vector<1x256xf32> to vector<2x256xf32>
    %9 = arith.mulf %1, %8 : vector<2x256xf32>
    %10 = arith.subf %7, %9 : vector<2x256xf32>
    %11 = vector.broadcast %3 : vector<1x256xf32> to vector<2x256xf32>
    %12 = arith.mulf %0, %11 : vector<2x256xf32>
    %13 = vector.broadcast %2 : vector<1x256xf32> to vector<2x256xf32>
    %14 = arith.mulf %1, %13 : vector<2x256xf32>
    %15 = arith.addf %12, %14 : vector<2x256xf32>
    %16 = vector.broadcast %4 : vector<1x256xf32> to vector<2x256xf32>
    %17 = arith.addf %10, %16 : vector<2x256xf32>
    %c0_11 = arith.constant 0 : index
    %c0_12 = arith.constant 0 : index
    %18 = vector.load %arg7[%c0_11, %c0_12] : memref<2x256xf32, #tpu.memory_space<vmem>>, vector<2x256xf32>
    tpu.vector_store %arg7[%c0_11, %c0_12], %17 {strides = array<i32>} : memref<2x256xf32, #tpu.memory_space<vmem>>, vector<2x256xf32>,
    %19 = vector.broadcast %5 : vector<1x256xf32> to vector<2x256xf32>
    %20 = arith.addf %15, %19 : vector<2x256xf32>
    %c0_13 = arith.constant 0 : index
    %c0_14 = arith.constant 0 : index
    %21 = vector.load %arg8[%c0_13, %c0_14] : memref<2x256xf32, #tpu.memory_space<vmem>>, vector<2x256xf32>
    tpu.vector_store %arg8[%c0_13, %c0_14], %20 {strides = array<i32>} : memref<2x256xf32, #tpu.memory_space<vmem>>, vector<2x256xf32>,
    return
  }
  func.func @transform_0(%arg0: i32) -> (i32, i32) {
    %c0_i32 = arith.constant 0 : i32
    %c0_i32_0 = arith.constant 0 : i32
    %c0_i32_1 = arith.constant 0 : i32
    return %c0_i32, %c0_i32_0 : i32, i32
  }
  func.func @transform_1(%arg0: i32) -> (i32, i32) {
    %c0_i32 = arith.constant 0 : i32
    %c0_i32_0 = arith.constant 0 : i32
    %c0_i32_1 = arith.constant 0 : i32
    return %c0_i32, %c0_i32_0 : i32, i32
  }
  func.func @transform_2(%arg0: i32) -> (i32, i32) {
    %c0_i32 = arith.constant 0 : i32
    %c0_i32_0 = arith.constant 0 : i32
    %c0_i32_1 = arith.constant 0 : i32
    return %c0_i32, %c0_i32_0 : i32, i32
  }
  func.func @transform_3(%arg0: i32) -> (i32, i32) {
    %c0_i32 = arith.constant 0 : i32
    %c0_i32_0 = arith.constant 0 : i32
    %c0_i32_1 = arith.constant 0 : i32
    return %c0_i32, %c0_i32_0 : i32, i32
  }
  func.func @transform_4(%arg0: i32) -> (i32, i32) {
    %c0_i32 = arith.constant 0 : i32
    %c0_i32_0 = arith.constant 0 : i32
    %c0_i32_1 = arith.constant 0 : i32
    return %c0_i32, %c0_i32_0 : i32, i32
  }
  func.func @transform_5(%arg0: i32) -> (i32, i32) {
    %c0_i32 = arith.constant 0 : i32
    %c0_i32_0 = arith.constant 0 : i32
    %c0_i32_1 = arith.constant 0 : i32
    return %c0_i32, %c0_i32_0 : i32, i32
  }
  func.func @transform_6(%arg0: i32) -> (i32, i32) {
    %c0_i32 = arith.constant 0 : i32
    %c0_i32_0 = arith.constant 0 : i32
    %c0_i32_1 = arith.constant 0 : i32
    return %c0_i32, %c0_i32_0 : i32, i32
  }
  func.func @transform_7(%arg0: i32) -> (i32, i32) {
    %c0_i32 = arith.constant 0 : i32
    %c0_i32_0 = arith.constant 0 : i32
    %c0_i32_1 = arith.constant 0 : i32
    return %c0_i32, %c0_i32_0 : i32, i32
  }
}

</mosaic_0001>

<llo_original>
// kernel: tpu_custom_call.1
$region0: #{tpu_custom_call.1}
  #allocation0 [shape = 'u32[]', space=smem, size = 0x4, offset = 0x4, fixed_abs, tag = 'smem constant byte address 0x4 - core index']
  #allocation1 [shape = 'u32[144,128]{1,0:T(1,128)}', space=vmem, size = 0x12000, scoped, tag = 'internal scratch']
  %s0 = inlined_call_operand.hbm [shape: f32[2,256], index: 0, kind: input, shape index: {}]
  %s1 = inlined_call_operand.hbm [shape: f32[2,256], index: 1, kind: input, shape index: {}]
  %s2 = inlined_call_operand.vmem [shape: f32[1,256], index: 2, kind: input, shape index: {}]
  %s3 = inlined_call_operand.vmem [shape: f32[1,256], index: 3, kind: input, shape index: {}]
  %s4 = inlined_call_operand.vmem [shape: f32[1,256], index: 4, kind: input, shape index: {}]
  %s5 = inlined_call_operand.vmem [shape: f32[1,256], index: 5, kind: input, shape index: {}]
  %s6 = inlined_call_operand.hbm [shape: f32[2,256], index: 6, kind: output, shape index: {0}]
  %s7 = inlined_call_operand.hbm [shape: f32[2,256], index: 7, kind: output, shape index: {1}]
  %8 = xla_tuple %s6, %s7
  %s9 = sld [smem:[#allocation0]]
  $region50: #{tpu_custom_call.1} parent=0
    _
  %s11 = ssub.s32 1, %s9
  %s12 = scalar_select 0, %s11, %s9
  $region1: #{tpu_custom_call.1} parent=0
    #allocation2 [shape = 'u8[2048]{0}', space=vmem, size = 0x800, scoped, tag = 'input window, operand 0, single buffered']
    #allocation3 [shape = 's32[1]{0}', space=sflag, size = 0x4, scoped, tag = 'scoped memory for tpu_custom_call.1']
    #allocation4 [shape = 's32[1]{0}', space=sflag, size = 0x4, scoped, tag = 'scoped memory for tpu_custom_call.1']
    #allocation5 [shape = 'u8[2048]{0}', space=vmem, size = 0x800, scoped, tag = 'input window, operand 1, single buffered']
    #allocation6 [shape = 's32[1]{0}', space=sflag, size = 0x4, scoped, tag = 'scoped memory for tpu_custom_call.1']
    #allocation7 [shape = 'u8[2048]{0}', space=vmem, size = 0x800, scoped, tag = 'output window, operand 0, single buffered']
    #allocation8 [shape = 'u8[2048]{0}', space=vmem, size = 0x800, scoped, tag = 'output window, operand 1, single buffered']
    #allocation9 [shape = 's32[1]{0}', space=sflag, size = 0x4, scoped, tag = 'scoped memory for tpu_custom_call.1']
    %13 = vsyncpa [#allocation3], 0
    %14 = vsyncpa [#allocation6], 0
    %15 = vsyncpa [#allocation4], 0
    %16 = vsyncpa [#allocation9], 0
    // Predicated region
    $region2: #{tpu_custom_call.1} parent=1 // pred_check
      _
    $region3: #{tpu_custom_call.1} parent=1 // pred_check_branch
      %18 = sbr.rel (0) target = $region5
    $region4: #{tpu_custom_call.1} parent=1 // pred_region
      %s20 = ssub.s32 64, 64
      %21 = vsyncadd [#allocation3], %s20
      %s23 = sshll.u32 [#allocation2], 4
      %s24 = int_to_ptr.vmem [resolvable:$true] %s23
      %26 = dma.hbm_to_vmem [thread:$0]  %s0, 64, %s24, [#allocation3]
    $region5: #{tpu_custom_call.1} parent=1 // pred_fallthru
      _
    // Predicated region
    $region6: #{tpu_custom_call.1} parent=1 // pred_check
      _
    $region7: #{tpu_custom_call.1} parent=1 // pred_check_branch
      %28 = sbr.rel (0) target = $region9
    $region8: #{tpu_custom_call.1} parent=1 // pred_region
      %s30 = ssub.s32 64, 64
      %31 = vsyncadd [#allocation6], %s30
      %s33 = sshll.u32 [#allocation5], 4
      %s34 = int_to_ptr.vmem [resolvable:$true] %s33
      %36 = dma.hbm_to_vmem [thread:$0]  %s1, 64, %s34, [#allocation6]
    $region9: #{tpu_custom_call.1} parent=1 // pred_fallthru
      _
    // Predicated region
    $region10: #{tpu_custom_call.1} parent=1 // pred_check
      _
    $region11: #{tpu_custom_call.1} parent=1 // pred_check_branch
      %38 = sbr.rel (0) target = $region13
    $region12: #{tpu_custom_call.1} parent=1 // pred_region
      _
    $region13: #{tpu_custom_call.1} parent=1 // pred_fallthru
      _
    // Predicated region
    $region14: #{tpu_custom_call.1} parent=1 // pred_check
      _
    $region15: #{tpu_custom_call.1} parent=1 // pred_check_branch
      %40 = sbr.rel (0) target = $region17
    $region16: #{tpu_custom_call.1} parent=1 // pred_region
      _
    $region17: #{tpu_custom_call.1} parent=1 // pred_fallthru
      _
    // Predicated region
    $region18: #{tpu_custom_call.1} parent=1 // pred_check
      _
    $region19: #{tpu_custom_call.1} parent=1 // pred_check_branch
      %42 = sbr.rel (0) target = $region21
    $region20: #{tpu_custom_call.1} parent=1 // pred_region
      _
    $region21: #{tpu_custom_call.1} parent=1 // pred_fallthru
      _
    // Predicated region
    $region22: #{tpu_custom_call.1} parent=1 // pred_check
      _
    $region23: #{tpu_custom_call.1} parent=1 // pred_check_branch
      %44 = sbr.rel (0) target = $region25
    $region24: #{tpu_custom_call.1} parent=1 // pred_region
      _
    $region25: #{tpu_custom_call.1} parent=1 // pred_fallthru
      _
    // Predicated region
    $region26: #{tpu_custom_call.1} parent=1 // pred_check
      _
    $region27: #{tpu_custom_call.1} parent=1 // pred_check_branch
      %46 = sbr.rel (0) target = $region29
    $region28: #{tpu_custom_call.1} parent=1 // pred_region
      %47 = dma.done [#allocation3], 64
    $region29: #{tpu_custom_call.1} parent=1 // pred_fallthru
      _
    // Predicated region
    $region30: #{tpu_custom_call.1} parent=1 // pred_check
      _
    $region31: #{tpu_custom_call.1} parent=1 // pred_check_branch
      %49 = sbr.rel (0) target = $region33
    $region32: #{tpu_custom_call.1} parent=1 // pred_region
      %50 = dma.done [#allocation6], 64
    $region33: #{tpu_custom_call.1} parent=1 // pred_fallthru
      _
    %v51 = vld [vmem:[#allocation2] sm:$0xf]
    %v52 = vld [vmem:[#allocation5] sm:$0xf]
    %v53 = vld [vmem:[%s2] sm:$0x3]
    %v54 = vld [vmem:[%s3] sm:$0x3]
    %v55 = vld [vmem:[%s4] sm:$0x3]
    %v56 = vld [vmem:[%s5] sm:$0x3]
    %v58 = vlaneseq
    %v59 = vshrl.u32 %v58, 7
    %v60 = vsub.s32 0, %v59
    %v61 = vrot.slane %v53, %v60
    %v62 = vlaneseq
    %v63 = vshrl.u32 %v62, 7
    %v64 = vsub.s32 1, %v63
    %v65 = vrot.slane %v53, %v64
    %v66 = vcombine.low %v61, %v65
    %v68 = vunpack.c.l.s4 1983009808
    %v69 = vunpack.c.0.s8 %v68
    %v70 = vlaneseq
    %v71 = vshrl.u32 %v70, 7
    %v72 = vsub.s32 %v69, %v71
    %v73 = vrot.slane %v66, %v72
    %v75 = vmul.f32 %v51, %v73
    %v77 = vlaneseq
    %v78 = vshrl.u32 %v77, 7
    %v79 = vsub.s32 0, %v78
    %v80 = vrot.slane %v54, %v79
    %v81 = vlaneseq
    %v82 = vshrl.u32 %v81, 7
    %v83 = vsub.s32 1, %v82
    %v84 = vrot.slane %v54, %v83
    %v85 = vcombine.low %v80, %v84
    %v87 = vunpack.c.l.s4 1983009808
    %v88 = vunpack.c.0.s8 %v87
    %v89 = vlaneseq
    %v90 = vshrl.u32 %v89, 7
    %v91 = vsub.s32 %v88, %v90
    %v92 = vrot.slane %v85, %v91
    %v94 = vmul.f32 %v52, %v92
    %v95 = vsub.f32 %v75, %v94
    %v96 = vmul.f32 %v51, %v92
    %v97 = vmul.f32 %v52, %v73
    %v98 = vadd.f32 %v96, %v97
    %v100 = vlaneseq
    %v101 = vshrl.u32 %v100, 7
    %v102 = vsub.s32 0, %v101
    %v103 = vrot.slane %v55, %v102
    %v104 = vlaneseq
    %v105 = vshrl.u32 %v104, 7
    %v106 = vsub.s32 1, %v105
    %v107 = vrot.slane %v55, %v106
    %v108 = vcombine.low %v103, %v107
    %v110 = vunpack.c.l.s4 1983009808
    %v111 = vunpack.c.0.s8 %v110
    %v112 = vlaneseq
    %v113 = vshrl.u32 %v112, 7
    %v114 = vsub.s32 %v111, %v113
    %v115 = vrot.slane %v108, %v114
    %v117 = vadd.f32 %v95, %v115
    %118 = vst [vmem:[#allocation7] sm:$0xf] %v117
    %v120 = vlaneseq
    %v121 = vshrl.u32 %v120, 7
    %v122 = vsub.s32 0, %v121
    %v123 = vrot.slane %v56, %v122
    %v124 = vlaneseq
    %v125 = vshrl.u32 %v124, 7
    %v126 = vsub.s32 1, %v125
    %v127 = vrot.slane %v56, %v126
    %v128 = vcombine.low %v123, %v127
    %v130 = vunpack.c.l.s4 1983009808
    %v131 = vunpack.c.0.s8 %v130
    %v132 = vlaneseq
    %v133 = vshrl.u32 %v132, 7
    %v134 = vsub.s32 %v131, %v133
    %v135 = vrot.slane %v128, %v134
    %v137 = vadd.f32 %v98, %v135
    %138 = vst [vmem:[#allocation8] sm:$0xf] %v137
    // Predicated region
    $region34: #{tpu_custom_call.1} parent=1 // pred_check
      _
    $region35: #{tpu_custom_call.1} parent=1 // pred_check_branch
      %140 = sbr.rel (0) target = $region37
    $region36: #{tpu_custom_call.1} parent=1 // pred_region
      %s142 = ssub.s32 64, 64
      %143 = vsyncadd [#allocation4], %s142
      %s145 = sshll.u32 [#allocation7], 4
      %s146 = int_to_ptr.vmem [resolvable:$true] %s145
      %148 = dma.vmem_to_hbm [thread:$0]  %s146, 64, %s6, [#allocation4]
    $region37: #{tpu_custom_call.1} parent=1 // pred_fallthru
      _
    // Predicated region
    $region38: #{tpu_custom_call.1} parent=1 // pred_check
      _
    $region39: #{tpu_custom_call.1} parent=1 // pred_check_branch
      %150 = sbr.rel (0) target = $region41
    $region40: #{tpu_custom_call.1} parent=1 // pred_region
      %s152 = ssub.s32 64, 64
      %153 = vsyncadd [#allocation9], %s152
      %s155 = sshll.u32 [#allocation8], 4
      %s156 = int_to_ptr.vmem [resolvable:$true] %s155
      %158 = dma.vmem_to_hbm [thread:$0]  %s156, 64, %s7, [#allocation9]
    $region41: #{tpu_custom_call.1} parent=1 // pred_fallthru
      _
    // Predicated region
    $region42: #{tpu_custom_call.1} parent=1 // pred_check
      _
    $region43: #{tpu_custom_call.1} parent=1 // pred_check_branch
      %160 = sbr.rel (0) target = $region45
    $region44: #{tpu_custom_call.1} parent=1 // pred_region
      %161 = dma.done [#allocation4], 64
    $region45: #{tpu_custom_call.1} parent=1 // pred_fallthru
      _
    // Predicated region
    $region46: #{tpu_custom_call.1} parent=1 // pred_check
      _
    $region47: #{tpu_custom_call.1} parent=1 // pred_check_branch
      %163 = sbr.rel (0) target = $region49
    $region48: #{tpu_custom_call.1} parent=1 // pred_region
      %164 = dma.done [#allocation9], 64
    $region49: #{tpu_custom_call.1} parent=1 // pred_fallthru
      _
    %165 = vsyncpa [#allocation3], 1
    %166 = vsyncpa [#allocation6], 1
    %167 = vsyncpa [#allocation4], 1
    %168 = vsyncpa [#allocation9], 1

</llo_original>
